<compile_context>
chip_gen: v5e
topology: v5e:2x2
jax: 0.10.0
libtpu: 0.0.40
codegen_flags: <defaults>
</compile_context>

<pallas_src>
import functools
import math

import jax
import jax.numpy as jnp
from jax.experimental import pallas as pl
from jax.experimental.pallas import tpu as pltpu


def _round_up(x: int, m: int) -> int:
    return ((x + m - 1) // m) * m


def _multilinear_kernel(*refs, groups: int, dim_in: int, dim_out: int,
                        has_bias: bool, fuse_store: bool):
    # refs: x_ref (tb, G*din), w_ref (G, din, dout), [b_ref (1, G*dout)], o_ref (tb, G*dout)
    if has_bias:
        x_ref, w_ref, b_ref, o_ref = refs
    else:
        x_ref, w_ref, o_ref = refs
        b_ref = None

    if fuse_store:
        # dim_out not 128-aligned: build the fused (tb, G*dout) row in vregs and
        # issue ONE wide store instead of G narrow masked stores.
        parts = []
        for g in range(groups):                       # static unroll, G is small
            xg = x_ref[:, g * dim_in:(g + 1) * dim_in]          # (tb, din) ref slice
            parts.append(jnp.dot(xg, w_ref[g],
                                 preferred_element_type=jnp.float32))
        y = jnp.concatenate(parts, axis=-1)                      # (tb, G*dout) f32
        if has_bias:
            y = y + b_ref[...].astype(jnp.float32)               # single broadcast add
        o_ref[...] = y.astype(o_ref.dtype)
    else:
        # dim_out is a multiple of 128: per-group stores are already lane-aligned
        # and unmasked; avoid keeping all G outputs live at once.
        for g in range(groups):
            xg = x_ref[:, g * dim_in:(g + 1) * dim_in]
            yg = jnp.dot(xg, w_ref[g], preferred_element_type=jnp.float32)
            if has_bias:
                yg = yg + b_ref[:, g * dim_out:(g + 1) * dim_out].astype(jnp.float32)
            o_ref[:, g * dim_out:(g + 1) * dim_out] = yg.astype(o_ref.dtype)


def _choose_batch_tile(B: int, G: int, din: int, dout: int, itemsize: int,
                       budget_bytes: int) -> int:
    """Batch tile from the VMEM budget. 0 => resident weights do not fit (fallback)."""
    # Grid-invariant weight + bias blocks (still double-buffered by the pipeline).
    fixed = 2 * (G * din * dout + G * dout) * itemsize
    per_row = 2 * (G * din + G * dout) * itemsize          # x + out blocks, double-buffered
    avail = int(budget_bytes) - fixed
    if avail < 8 * per_row:
        return 0
    tb = min(2048, avail // per_row)
    if tb >= B:
        # Whole batch in one full-extent block; split in two for megacore (v7x)
        # only when the resulting tiles stay large.
        half = _round_up((B + 1) // 2, 8)
        if half >= 256:
            return half
        return B
    return max(8, (tb // 8) * 8)


@functools.partial(jax.jit,
                   static_argnames=("size", "dim_in", "dim_out", "max_batch_tile"))
def multilinear_forward(x, weight, bias=None, *, size, dim_in, dim_out,
                        max_batch_tile=None):
    """
    x:      [..., *size, dim_in]
    weight: [G, dim_in, dim_out]  (G = prod(size); weight[g] == fs[g].weight.T,
                                   groups in row-major order over `size`)
    bias:   [G, dim_out] or None
    returns [..., *size, dim_out]
    """
    size = tuple(size)
    G = math.prod(size)
    batch_shape = x.shape[: x.ndim - len(size) - 1]
    B = int(math.prod(batch_shape)) if batch_shape else 1

    # Free, contiguous reshapes (no transpose / extra HBM pass).
    x2 = x.reshape(B, G * dim_in)
    w3 = weight.reshape(G, dim_in, dim_out)
    has_bias = bias is not None
    b2 = bias.reshape(1, G * dim_out) if has_bias else None

    itemsize = jnp.dtype(x.dtype).itemsize
    try:
        vmem_cap = int(pltpu.get_tpu_info().vmem_capacity_bytes)
    except Exception:
        vmem_cap = 64 * 1024 * 1024                      # safe everywhere (>= v7x physical)
    budget = min((3 * vmem_cap) // 4, 96 * 1024 * 1024)  # ~96 MiB v5e/v6e, ~48 MiB v7x

    tb = _choose_batch_tile(B, G, dim_in, dim_out, itemsize, int(budget * 0.85))
    if tb and max_batch_tile is not None:
        tb = min(tb, int(max_batch_tile))
        if tb < B:
            tb = max(8, (tb // 8) * 8)

    if tb == 0:
        # TODO(synk): group-axis grid (g outer) + K-reduction accumulator kernel for
        # per-group weights larger than the VMEM budget; use XLA for now.
        xf = x.reshape(B, G, dim_in).astype(jnp.float32)
        y = jnp.einsum("bgi,gio->bgo", xf, w3.astype(jnp.float32))
        if has_bias:
            y = y + bias.reshape(1, G, dim_out).astype(jnp.float32)
        return y.astype(x.dtype).reshape(*batch_shape, *size, dim_out)

    grid = (pl.cdiv(B, tb),)                 # non-dividing tail handled by Pallas clipping
    fuse_store = (dim_out % 128) != 0

    kernel = functools.partial(_multilinear_kernel, groups=G, dim_in=dim_in,
                               dim_out=dim_out, has_bias=has_bias,
                               fuse_store=fuse_store)

    in_specs = [
        pl.BlockSpec((tb, G * dim_in), lambda b: (b, 0)),          # batch-tiled activations
        pl.BlockSpec((G, dim_in, dim_out), lambda b: (0, 0, 0)),   # grid-invariant weights
    ]
    args = [x2, w3]
    if has_bias:
        in_specs.append(pl.BlockSpec((1, G * dim_out), lambda b: (0, 0)))
        args.append(b2)

    cost = pl.CostEstimate(
        flops=2 * B * G * dim_in * dim_out,
        transcendentals=0,
        bytes_accessed=(B * G * (dim_in + dim_out) + G * dim_in * dim_out
                        + (G * dim_out if has_bias else 0)) * itemsize,
    )

    out = pl.pallas_call(
        kernel,
        out_shape=jax.ShapeDtypeStruct((B, G * dim_out), x.dtype),
        grid_spec=pltpu.PrefetchScalarGridSpec(
            num_scalar_prefetch=0,
            grid=grid,
            in_specs=in_specs,
            out_specs=pl.BlockSpec((tb, G * dim_out), lambda b: (b, 0)),
        ),
        compiler_params=pltpu.CompilerParams(
            dimension_semantics=("parallel",),
            vmem_limit_bytes=int(budget),
        ),
        cost_estimate=cost,
    )(*args)

    return out.reshape(*batch_shape, *size, dim_out)


def _reference(x, weight, bias, size, dim_in, dim_out):
    size = tuple(size)
    G = math.prod(size)
    batch_shape = x.shape[: x.ndim - len(size) - 1]
    B = int(math.prod(batch_shape)) if batch_shape else 1
    xf = x.reshape(B, G, dim_in).astype(jnp.float32)
    y = jnp.einsum("bgi,gio->bgo", xf, weight.reshape(G, dim_in, dim_out).astype(jnp.float32))
    if bias is not None:
        y = y + bias.reshape(1, G, dim_out).astype(jnp.float32)
    return y.astype(x.dtype).reshape(*batch_shape, *size, dim_out)


def _run_case(key, batch_shape, size, dim_in, dim_out, use_bias, max_batch_tile=None):
    G = math.prod(size)
    kx, kw, kb = jax.random.split(key, 3)
    x = jax.random.normal(kx, (*batch_shape, *size, dim_in), dtype=jnp.float32)
    weight = jax.random.normal(kw, (G, dim_in, dim_out), dtype=jnp.float32) * 0.05
    bias = (jax.random.normal(kb, (G, dim_out), dtype=jnp.float32) * 0.05) if use_bias else None

    y = multilinear_forward(x, weight, bias, size=size, dim_in=dim_in,
                            dim_out=dim_out, max_batch_tile=max_batch_tile)
    y = jax.block_until_ready(y)

    y_ref = _reference(x, weight, bias, size, dim_in, dim_out)
    assert y.shape == (*batch_shape, *size, dim_out), y.shape
    assert jnp.allclose(y, y_ref, atol=1e-4, rtol=1e-4), "mismatch vs reference"


if __name__ == "__main__":
    key = jax.random.PRNGKey(0)
    k1, k2, k3 = jax.random.split(key, 3)

    # 1) Basic case: size=(2,3) -> G=6, batch (2,4), bias on.
    _run_case(k1, batch_shape=(2, 4), size=(2, 3), dim_in=32, dim_out=16, use_bias=True)

    # 2) bias=None path, odd dims, B < 8 (full-extent single block).
    _run_case(k2, batch_shape=(5,), size=(3,), dim_in=24, dim_out=40, use_bias=False)

    # 3) Non-dividing batch tail (B=20, tile 8 -> partial final block, no padding passes).
    _run_case(k3, batch_shape=(20,), size=(2,), dim_in=32, dim_out=16, use_bias=True,
              max_batch_tile=8)

    print("KERNEL_OK")
</pallas_src>

<mosaic_0001>
module attributes {stable_mosaic.version = 11 : i64} {
  func.func @_multilinear_kernel(%arg0: i32, %arg1: memref<8x192xf32, #tpu.memory_space<vmem>>, %arg2: memref<6x32x16xf32, #tpu.memory_space<vmem>>, %arg3: memref<1x96xf32, #tpu.memory_space<vmem>>, %arg4: memref<8x96xf32, #tpu.memory_space<vmem>>) attributes {dimension_semantics = [#tpu.dimension_semantics<parallel>], iteration_bounds = array<i64: 1>, scalar_prefetch = 0 : i64, scratch_operands = 0 : i64, tpu.core_type = #tpu.core_type<tc>, window_params = [{transform_indices = @transform_0, window_bounds = array<i64: 8, 192>}, {pipeline_mode = #tpu.pipeline_mode<synchronous>, transform_indices = @transform_1, window_bounds = array<i64: 6, 32, 16>}, {pipeline_mode = #tpu.pipeline_mode<synchronous>, transform_indices = @transform_2, window_bounds = array<i64: 1, 96>}, {transform_indices = @transform_3, window_bounds = array<i64: 8, 96>}]} {
    %c0 = arith.constant 0 : index
    %c0_0 = arith.constant 0 : index
    %0 = vector.load %arg1[%c0, %c0_0] : memref<8x192xf32, #tpu.memory_space<vmem>>, vector<8x32xf32>
    %c0_1 = arith.constant 0 : index
    %c0_2 = arith.constant 0 : index
    %c0_3 = arith.constant 0 : index
    %1 = vector.load %arg2[%c0_1, %c0_2, %c0_3] : memref<6x32x16xf32, #tpu.memory_space<vmem>>, vector<1x32x16xf32>
    %2 = vector.shape_cast %1 : vector<1x32x16xf32> to vector<32x16xf32>
    %cst = arith.constant dense<0.000000e+00> : vector<8x16xf32>
    %3 = tpu.matmul %0, %2, %cst {dimension_numbers = #tpu.dot_dimension_numbers<[1], [0], [0], [1], [0, 0, 1, 1], [], []>} : vector<8x32xf32>, vector<32x16xf32>, vector<8x16xf32> -> vector<8x16xf32>
    %c0_4 = arith.constant 0 : index
    %c32 = arith.constant 32 : index
    %4 = vector.load %arg1[%c0_4, %c32] : memref<8x192xf32, #tpu.memory_space<vmem>>, vector<8x32xf32>
    %c1 = arith.constant 1 : index
    %c0_5 = arith.constant 0 : index
    %c0_6 = arith.constant 0 : index
    %5 = vector.load %arg2[%c1, %c0_5, %c0_6] : memref<6x32x16xf32, #tpu.memory_space<vmem>>, vector<1x32x16xf32>
    %6 = vector.shape_cast %5 : vector<1x32x16xf32> to vector<32x16xf32>
    %cst_7 = arith.constant dense<0.000000e+00> : vector<8x16xf32>
    %7 = tpu.matmul %4, %6, %cst_7 {dimension_numbers = #tpu.dot_dimension_numbers<[1], [0], [0], [1], [0, 0, 1, 1], [], []>} : vector<8x32xf32>, vector<32x16xf32>, vector<8x16xf32> -> vector<8x16xf32>
    %c0_8 = arith.constant 0 : index
    %c64 = arith.constant 64 : index
    %8 = vector.load %arg1[%c0_8, %c64] : memref<8x192xf32, #tpu.memory_space<vmem>>, vector<8x32xf32>
    %c2 = arith.constant 2 : index
    %c0_9 = arith.constant 0 : index
    %c0_10 = arith.constant 0 : index
    %9 = vector.load %arg2[%c2, %c0_9, %c0_10] : memref<6x32x16xf32, #tpu.memory_space<vmem>>, vector<1x32x16xf32>
    %10 = vector.shape_cast %9 : vector<1x32x16xf32> to vector<32x16xf32>
    %cst_11 = arith.constant dense<0.000000e+00> : vector<8x16xf32>
    %11 = tpu.matmul %8, %10, %cst_11 {dimension_numbers = #tpu.dot_dimension_numbers<[1], [0], [0], [1], [0, 0, 1, 1], [], []>} : vector<8x32xf32>, vector<32x16xf32>, vector<8x16xf32> -> vector<8x16xf32>
    %c0_12 = arith.constant 0 : index
    %c96 = arith.constant 96 : index
    %12 = vector.load %arg1[%c0_12, %c96] : memref<8x192xf32, #tpu.memory_space<vmem>>, vector<8x32xf32>
    %c3 = arith.constant 3 : index
    %c0_13 = arith.constant 0 : index
    %c0_14 = arith.constant 0 : index
    %13 = vector.load %arg2[%c3, %c0_13, %c0_14] : memref<6x32x16xf32, #tpu.memory_space<vmem>>, vector<1x32x16xf32>
    %14 = vector.shape_cast %13 : vector<1x32x16xf32> to vector<32x16xf32>
    %cst_15 = arith.constant dense<0.000000e+00> : vector<8x16xf32>
    %15 = tpu.matmul %12, %14, %cst_15 {dimension_numbers = #tpu.dot_dimension_numbers<[1], [0], [0], [1], [0, 0, 1, 1], [], []>} : vector<8x32xf32>, vector<32x16xf32>, vector<8x16xf32> -> vector<8x16xf32>
    %c0_16 = arith.constant 0 : index
    %c128 = arith.constant 128 : index
    %16 = vector.load %arg1[%c0_16, %c128] : memref<8x192xf32, #tpu.memory_space<vmem>>, vector<8x32xf32>
    %c4 = arith.constant 4 : index
    %c0_17 = arith.constant 0 : index
    %c0_18 = arith.constant 0 : index
    %17 = vector.load %arg2[%c4, %c0_17, %c0_18] : memref<6x32x16xf32, #tpu.memory_space<vmem>>, vector<1x32x16xf32>
    %18 = vector.shape_cast %17 : vector<1x32x16xf32> to vector<32x16xf32>
    %cst_19 = arith.constant dense<0.000000e+00> : vector<8x16xf32>
    %19 = tpu.matmul %16, %18, %cst_19 {dimension_numbers = #tpu.dot_dimension_numbers<[1], [0], [0], [1], [0, 0, 1, 1], [], []>} : vector<8x32xf32>, vector<32x16xf32>, vector<8x16xf32> -> vector<8x16xf32>
    %c0_20 = arith.constant 0 : index
    %c160 = arith.constant 160 : index
    %20 = vector.load %arg1[%c0_20, %c160] : memref<8x192xf32, #tpu.memory_space<vmem>>, vector<8x32xf32>
    %c5 = arith.constant 5 : index
    %c0_21 = arith.constant 0 : index
    %c0_22 = arith.constant 0 : index
    %21 = vector.load %arg2[%c5, %c0_21, %c0_22] : memref<6x32x16xf32, #tpu.memory_space<vmem>>, vector<1x32x16xf32>
    %22 = vector.shape_cast %21 : vector<1x32x16xf32> to vector<32x16xf32>
    %cst_23 = arith.constant dense<0.000000e+00> : vector<8x16xf32>
    %23 = tpu.matmul %20, %22, %cst_23 {dimension_numbers = #tpu.dot_dimension_numbers<[1], [0], [0], [1], [0, 0, 1, 1], [], []>} : vector<8x32xf32>, vector<32x16xf32>, vector<8x16xf32> -> vector<8x16xf32>
    %24 = tpu.concatenate %3, %7, %11, %15, %19, %23 in 1 : vector<8x16xf32>, vector<8x16xf32>, vector<8x16xf32>, vector<8x16xf32>, vector<8x16xf32>, vector<8x16xf32> -> vector<8x96xf32>
    %c0_24 = arith.constant 0 : index
    %c0_25 = arith.constant 0 : index
    %25 = vector.load %arg3[%c0_24, %c0_25] : memref<1x96xf32, #tpu.memory_space<vmem>>, vector<1x96xf32>
    %26 = vector.broadcast %25 : vector<1x96xf32> to vector<8x96xf32>
    %27 = arith.addf %24, %26 : vector<8x96xf32>
    %c0_26 = arith.constant 0 : index
    %c0_27 = arith.constant 0 : index
    %28 = vector.load %arg4[%c0_26, %c0_27] : memref<8x96xf32, #tpu.memory_space<vmem>>, vector<8x96xf32>
    tpu.vector_store %arg4[%c0_26, %c0_27], %27 {strides = array<i32>} : memref<8x96xf32, #tpu.memory_space<vmem>>, vector<8x96xf32>,
    return
  }
  func.func @transform_0(%arg0: i32) -> (i32, i32) {
    %c0_i32 = arith.constant 0 : i32
    %c0_i32_0 = arith.constant 0 : i32
    return %arg0, %c0_i32 : i32, i32
  }
  func.func @transform_1(%arg0: i32) -> (i32, i32, i32) {
    %c0_i32 = arith.constant 0 : i32
    %c0_i32_0 = arith.constant 0 : i32
    %c0_i32_1 = arith.constant 0 : i32
    %c0_i32_2 = arith.constant 0 : i32
    return %c0_i32, %c0_i32_0, %c0_i32_1 : i32, i32, i32
  }
  func.func @transform_2(%arg0: i32) -> (i32, i32) {
    %c0_i32 = arith.constant 0 : i32
    %c0_i32_0 = arith.constant 0 : i32
    %c0_i32_1 = arith.constant 0 : i32
    return %c0_i32, %c0_i32_0 : i32, i32
  }
  func.func @transform_3(%arg0: i32) -> (i32, i32) {
    %c0_i32 = arith.constant 0 : i32
    %c0_i32_0 = arith.constant 0 : i32
    return %arg0, %c0_i32 : i32, i32
  }
}

</mosaic_0001>

<llo_original>
// kernel: multilinear_forward.1
$region0: #{multilinear_forward.1}
  #allocation0 [shape = 'u32[]', space=smem, size = 0x4, offset = 0x4, fixed_abs, tag = 'smem constant byte address 0x4 - core index']
  #allocation1 [shape = 'u32[72,128]{1,0:T(1,128)}', space=vmem, size = 0x9000, scoped, tag = 'internal scratch']
  %s0 = inlined_call_operand.vmem [shape: f32[8,192], index: 0, kind: input, shape index: {}]
  %s1 = inlined_call_operand.vmem [shape: f32[6,32,16], index: 1, kind: input, shape index: {}]
  %s2 = inlined_call_operand.vmem [shape: f32[1,96], index: 2, kind: input, shape index: {}]
  %s3 = inlined_call_operand.vmem [shape: f32[8,96], index: 3, kind: output, shape index: {}]
  %s4 = sld [smem:[#allocation0]]
  $region22: #{multilinear_forward.1} parent=0
    _
  %s6 = ssub.s32 1, %s4
  %s7 = scalar_select 0, %s6, %s4
  // Predicated region
  $region2: #{multilinear_forward.1} parent=0 // pred_check
    _
  $region3: #{multilinear_forward.1} parent=0 // pred_check_branch
    %9 = sbr.rel (0) target = $region5
  $region4: #{multilinear_forward.1} parent=0 // pred_region
    _
  $region5: #{multilinear_forward.1} parent=0 // pred_fallthru
    _
  // Predicated region
  $region6: #{multilinear_forward.1} parent=0 // pred_check
    _
  $region7: #{multilinear_forward.1} parent=0 // pred_check_branch
    %11 = sbr.rel (0) target = $region9
  $region8: #{multilinear_forward.1} parent=0 // pred_region
    _
  $region9: #{multilinear_forward.1} parent=0 // pred_fallthru
    _
  // Predicated region
  $region10: #{multilinear_forward.1} parent=0 // pred_check
    _
  $region11: #{multilinear_forward.1} parent=0 // pred_check_branch
    %13 = sbr.rel (0) target = $region13
  $region12: #{multilinear_forward.1} parent=0 // pred_region
    _
  $region13: #{multilinear_forward.1} parent=0 // pred_fallthru
    _
  %v14 = vld [vmem:[%s0] sm:$0xff]
  %v15 = vld [vmem:[%s1] sm:$0xff]
  %v16 = vld [vmem:[%s1 + $0x8] sm:$0xff]
  %v17 = vld [vmem:[%s1 + $0x10] sm:$0xff]
  %v18 = vld [vmem:[%s1 + $0x18] sm:$0xff]
  %vm19 = vcmask 261120
  %v21 = vsel %vm19, %v14, 0
  %23 = vmatpush.msra.mxu0 0.0
  %24 = vmatpush.msra.mxu0 0.0
  %25 = vmatpush.msra.mxu0 0.0
  %26 = vmatpush.msra.mxu0 0.0
  %27 = vmatpush.msra.mxu0 0.0
  %28 = vmatpush.msra.mxu0 0.0
  %29 = vmatpush.msra.mxu0 0.0
  %30 = vmatpush.msra.mxu0 0.0
  %31 = vmatpush.msra.mxu0 0.0
  %32 = vmatpush.msra.mxu0 0.0
  %33 = vmatpush.msra.mxu0 0.0
  %34 = vmatpush.msra.mxu0 0.0
  %35 = vmatpush.msra.mxu0 %v18
  %36 = vmatpush.msra.mxu0 %v17
  %37 = vmatpush.msra.mxu0 %v16
  %38 = vmatpush.msra.mxu0 %v15
  %39 = vmatmul.f32.gmra.mxu0 %v21
  %v40 = vpop.f32.mrf.mxu0
  %v41 = vadd.f32 0.0, %v40
  %42 = vdwg.mxu0
  %s43 = scalar_lea.vmem %s1, 32
  %v44 = vld [vmem:[%s43] sm:$0xff]
  %v45 = vld [vmem:[%s43 + $0x8] sm:$0xff]
  %v46 = vld [vmem:[%s43 + $0x10] sm:$0xff]
  %v47 = vld [vmem:[%s43 + $0x18] sm:$0xff]
  %48 = vrot.lane.b32.xlu0 %v14, 96
  %v49 = vpop.permute.xlu0 %48
  %v50 = vsel %vm19, %v49, 0
  %52 = vmatpush.msra.mxu0 0.0
  %53 = vmatpush.msra.mxu0 0.0
  %54 = vmatpush.msra.mxu0 0.0
  %55 = vmatpush.msra.mxu0 0.0
  %56 = vmatpush.msra.mxu0 0.0
  %57 = vmatpush.msra.mxu0 0.0
  %58 = vmatpush.msra.mxu0 0.0
  %59 = vmatpush.msra.mxu0 0.0
  %60 = vmatpush.msra.mxu0 0.0
  %61 = vmatpush.msra.mxu0 0.0
  %62 = vmatpush.msra.mxu0 0.0
  %63 = vmatpush.msra.mxu0 0.0
  %64 = vmatpush.msra.mxu0 %v47
  %65 = vmatpush.msra.mxu0 %v46
  %66 = vmatpush.msra.mxu0 %v45
  %67 = vmatpush.msra.mxu0 %v44
  %68 = vmatmul.f32.gmra.mxu0 %v50
  %v69 = vpop.f32.mrf.mxu0
  %v70 = vadd.f32 0.0, %v69
  %71 = vdwg.mxu0
  %s72 = scalar_lea.vmem %s1, 64
  %v73 = vld [vmem:[%s72] sm:$0xff]
  %v74 = vld [vmem:[%s72 + $0x8] sm:$0xff]
  %v75 = vld [vmem:[%s72 + $0x10] sm:$0xff]
  %v76 = vld [vmem:[%s72 + $0x18] sm:$0xff]
  %77 = vrot.lane.b32.xlu0 %v14, 64
  %v78 = vpop.permute.xlu0 %77
  %v79 = vsel %vm19, %v78, 0
  %81 = vmatpush.msra.mxu0 0.0
  %82 = vmatpush.msra.mxu0 0.0
  %83 = vmatpush.msra.mxu0 0.0
  %84 = vmatpush.msra.mxu0 0.0
  %85 = vmatpush.msra.mxu0 0.0
  %86 = vmatpush.msra.mxu0 0.0
  %87 = vmatpush.msra.mxu0 0.0
  %88 = vmatpush.msra.mxu0 0.0
  %89 = vmatpush.msra.mxu0 0.0
  %90 = vmatpush.msra.mxu0 0.0
  %91 = vmatpush.msra.mxu0 0.0
  %92 = vmatpush.msra.mxu0 0.0
  %93 = vmatpush.msra.mxu0 %v76
  %94 = vmatpush.msra.mxu0 %v75
  %95 = vmatpush.msra.mxu0 %v74
  %96 = vmatpush.msra.mxu0 %v73
  %97 = vmatmul.f32.gmra.mxu0 %v79
  %v98 = vpop.f32.mrf.mxu0
  %v99 = vadd.f32 0.0, %v98
  %100 = vdwg.mxu0
  %s101 = scalar_lea.vmem %s1, 96
  %v102 = vld [vmem:[%s101] sm:$0xff]
  %v103 = vld [vmem:[%s101 + $0x8] sm:$0xff]
  %v104 = vld [vmem:[%s101 + $0x10] sm:$0xff]
  %v105 = vld [vmem:[%s101 + $0x18] sm:$0xff]
  %106 = vrot.lane.b32.xlu0 %v14, 32
  %v107 = vpop.permute.xlu0 %106
  %v108 = vsel %vm19, %v107, 0
  %110 = vmatpush.msra.mxu0 0.0
  %111 = vmatpush.msra.mxu0 0.0
  %112 = vmatpush.msra.mxu0 0.0
  %113 = vmatpush.msra.mxu0 0.0
  %114 = vmatpush.msra.mxu0 0.0
  %115 = vmatpush.msra.mxu0 0.0
  %116 = vmatpush.msra.mxu0 0.0
  %117 = vmatpush.msra.mxu0 0.0
  %118 = vmatpush.msra.mxu0 0.0
  %119 = vmatpush.msra.mxu0 0.0
  %120 = vmatpush.msra.mxu0 0.0
  %121 = vmatpush.msra.mxu0 0.0
  %122 = vmatpush.msra.mxu0 %v105
  %123 = vmatpush.msra.mxu0 %v104
  %124 = vmatpush.msra.mxu0 %v103
  %125 = vmatpush.msra.mxu0 %v102
  %126 = vmatmul.f32.gmra.mxu0 %v108
  %v127 = vpop.f32.mrf.mxu0
  %v128 = vadd.f32 0.0, %v127
  %129 = vdwg.mxu0
  %v130 = vld [vmem:[%s0 + $0x8] sm:$0xff]
  %s131 = scalar_lea.vmem %s1, 128
  %v132 = vld [vmem:[%s131] sm:$0xff]
  %v133 = vld [vmem:[%s131 + $0x8] sm:$0xff]
  %v134 = vld [vmem:[%s131 + $0x10] sm:$0xff]
  %v135 = vld [vmem:[%s131 + $0x18] sm:$0xff]
  %v137 = vsel %vm19, %v130, 0
  %139 = vmatpush.msra.mxu0 0.0
  %140 = vmatpush.msra.mxu0 0.0
  %141 = vmatpush.msra.mxu0 0.0
  %142 = vmatpush.msra.mxu0 0.0
  %143 = vmatpush.msra.mxu0 0.0
  %144 = vmatpush.msra.mxu0 0.0
  %145 = vmatpush.msra.mxu0 0.0
  %146 = vmatpush.msra.mxu0 0.0
  %147 = vmatpush.msra.mxu0 0.0
  %148 = vmatpush.msra.mxu0 0.0
  %149 = vmatpush.msra.mxu0 0.0
  %150 = vmatpush.msra.mxu0 0.0
  %151 = vmatpush.msra.mxu0 %v135
  %152 = vmatpush.msra.mxu0 %v134
  %153 = vmatpush.msra.mxu0 %v133
  %154 = vmatpush.msra.mxu0 %v132
  %155 = vmatmul.f32.gmra.mxu0 %v137
  %v156 = vpop.f32.mrf.mxu0
  %v157 = vadd.f32 0.0, %v156
  %158 = vdwg.mxu0
  %s159 = scalar_lea.vmem %s1, 160
  %v160 = vld [vmem:[%s159] sm:$0xff]
  %v161 = vld [vmem:[%s159 + $0x8] sm:$0xff]
  %v162 = vld [vmem:[%s159 + $0x10] sm:$0xff]
  %v163 = vld [vmem:[%s159 + $0x18] sm:$0xff]
  %164 = vrot.lane.b32.xlu0 %v130, 96
  %v165 = vpop.permute.xlu0 %164
  %v166 = vsel %vm19, %v165, 0
  %168 = vmatpush.msra.mxu0 0.0
  %169 = vmatpush.msra.mxu0 0.0
  %170 = vmatpush.msra.mxu0 0.0
  %171 = vmatpush.msra.mxu0 0.0
  %172 = vmatpush.msra.mxu0 0.0
  %173 = vmatpush.msra.mxu0 0.0
  %174 = vmatpush.msra.mxu0 0.0
  %175 = vmatpush.msra.mxu0 0.0
  %176 = vmatpush.msra.mxu0 0.0
  %177 = vmatpush.msra.mxu0 0.0
  %178 = vmatpush.msra.mxu0 0.0
  %179 = vmatpush.msra.mxu0 0.0
  %180 = vmatpush.msra.mxu0 %v163
  %181 = vmatpush.msra.mxu0 %v162
  %182 = vmatpush.msra.mxu0 %v161
  %183 = vmatpush.msra.mxu0 %v160
  %184 = vmatmul.f32.gmra.mxu0 %v166
  %v185 = vpop.f32.mrf.mxu0
  %v186 = vadd.f32 0.0, %v185
  %187 = vdwg.mxu0
  %189 = vrot.lane.b32.xlu0 %v70, 16
  %v190 = vpop.permute.xlu0 %189
  %193 = vrot.lane.b32.xlu0 %v99, 32
  %v194 = vpop.permute.xlu0 %193
  %197 = vrot.lane.b32.xlu0 %v128, 48
  %v198 = vpop.permute.xlu0 %197
  %201 = vrot.lane.b32.xlu0 %v157, 64
  %v202 = vpop.permute.xlu0 %201
  %205 = vrot.lane.b32.xlu0 %v186, 80
  %v206 = vpop.permute.xlu0 %205
  %vm208 = vcmask 130048
  %v209 = vsel %vm208, %v41, %v190
  %v210 = vsel %vm19, %v209, %v194
  %vm211 = vcmask 392192
  %v212 = vsel %vm211, %v210, %v198
  %vm213 = vcmask 523264
  %v214 = vsel %vm213, %v212, %v202
  %vm215 = vcmask 654336
  %v216 = vsel %vm215, %v214, %v206
  %v217 = vld [vmem:[%s2] sm:$0x1]
  %v219 = vperm.slane %v217, 0
  %v221 = vadd.f32 %v216, %v219
  %vm222 = vcmask 785408
  %223 = vst.msk [vmem:[%s3] sm:$0xff] %vm222, %v221
  // Predicated region
  $region14: #{multilinear_forward.1} parent=0 // pred_check
    _
  $region15: #{multilinear_forward.1} parent=0 // pred_check_branch
    %225 = sbr.rel (0) target = $region17
  $region16: #{multilinear_forward.1} parent=0 // pred_region
    _
  $region17: #{multilinear_forward.1} parent=0 // pred_fallthru
    _
  // Predicated region
  $region18: #{multilinear_forward.1} parent=0 // pred_check
    _
  $region19: #{multilinear_forward.1} parent=0 // pred_check_branch
    %227 = sbr.rel (0) target = $region21
  $region20: #{multilinear_forward.1} parent=0 // pred_region
    _
  $region21: #{multilinear_forward.1} parent=0 // pred_fallthru
    _

</llo_original>
